<compile_context>
chip_gen: v7x
topology: tpu7x:2x2x1
jax: 0.10.0
libtpu: 0.0.40
codegen_flags: <defaults>
</compile_context>

<pallas_src>
import functools

import numpy as np
import jax
import jax.numpy as jnp
from jax.experimental import pallas as pl
from jax.experimental.pallas import tpu as pltpu


def _pct_filter_bank(image_size, list_nl, realmag):
    """Build the (K, S, S) PCT filters exactly as the torch module does (numpy)."""
    S = image_size
    x = np.linspace(1.0, float(S), S)
    y = np.linspace(1.0, float(S), S)
    X, Y = np.meshgrid(x, y, indexing="ij")      # torch.meshgrid default is 'ij'
    c = (1.0 + S) / 2.0
    X = (X - c) / (c - 1.0)
    Y = (Y - c) / (c - 1.0)
    R = np.sqrt(X ** 2 + Y ** 2)
    Theta = np.arctan2(Y, X)
    mask = (R <= 1.0).astype(np.float64)

    filters = []
    for (n, l) in list_nl:
        amplitude = mask * np.cos(np.pi * n * R ** 2)
        # complex_result = amplitude * mask * exp(-1j * l * Theta)
        if realmag == 1:
            # |exp(-i*l*Theta)| == 1; mask is 0/1 so mask**2 == mask
            mag = np.abs(amplitude) * mask
        else:
            # Re(exp(-i*l*Theta)) == cos(l*Theta)
            mag = amplitude * mask * np.cos(l * Theta)
        filters.append(mag.astype(np.float32))
    return np.stack(filters, axis=0)             # (K, S, S)


def _build_toeplitz_flat(filters, W, KWp):
    """(K,S,S) filters -> (S*W, KWp) banded matrix (numpy, host-side).

    T[ki*W + wi, k*W + w] = filters[k, ki, wi - w + pad]   (0 elsewhere)

    With the im2col LHS L[row, ki*W + wi] = x_hpad[row_h + ki, wi] this
    reproduces F.conv2d's 'same'-padded cross-correlation along W for all K
    filters in a single matmul; W-direction zero padding is folded into the
    band structure. Columns >= K*W are zero (lane padding, only if needed).
    """
    K, S, _ = filters.shape
    pad = (S - 1) // 2
    T = np.zeros((S * W, KWp), np.float32)
    for k in range(K):
        for kj in range(S):
            wmin = max(0, pad - kj)
            wmax = min(W, W + pad - kj)
            if wmin >= wmax:
                continue
            w = np.arange(wmin, wmax)
            wi = w + kj - pad                      # input column index
            for ki in range(S):
                T[ki * W + wi, k * W + w] = filters[k, ki, kj]
    return T


def _pct_conv_kernel(x_ref, t_ref, o_ref, *, H, W, S, pad, P, SW, KWp):
    """One grid step: all K PCT filters applied to P image planes via ONE matmul.

    x_ref: VMEM (P, H, W)    unpadded input planes
    t_ref: VMEM (SW, KWp)    flattened banded filter matrix (resident)
    o_ref: VMEM (P, H, KWp)  outputs for all K filters, lane-dense
    """
    x = x_ref[...]

    # Build the im2col LHS by concatenating the S shifted row-blocks along the
    # contraction axis; only the halo rows are filled with zeros.
    bands = []
    for ki in range(S):                 # static, small S -> fully unrolled
        d = ki - pad                    # row shift of this filter tap
        if d < 0:
            band = jnp.concatenate(
                [jnp.zeros((P, -d, W), jnp.float32), x[:, :H + d, :]], axis=1)
        elif d > 0:
            band = jnp.concatenate(
                [x[:, d:, :], jnp.zeros((P, d, W), jnp.float32)], axis=1)
        else:
            band = x
        bands.append(band)
    lhs = jnp.concatenate(bands, axis=-1).reshape(P * H, SW)   # (P*H, S*W)

    # Single MXU push over the full S*W contraction; write straight to o_ref.
    res = jnp.dot(lhs, t_ref[...], preferred_element_type=jnp.float32)
    o_ref[...] = res.reshape(P, H, KWp)


def pct_kernel_layer_forward(image, image_size, list_nl, realmag):
    """Pallas equivalent of PCTKernelLayer(image_size, realmag)(image, list_nl).

    Returns a list of arrays, each (N, C, H, W), one per (n, l) in list_nl.
    """
    N, C, H, W = image.shape
    S = image_size
    K = len(list_nl)
    # TODO(synk): even S would need PyTorch's asymmetric 'same' padding; only odd S here.
    assert S % 2 == 1, "only odd kernel sizes (symmetric 'same' padding) supported"
    assert S <= H, "kernel taller than the image is not supported"
    pad = (S - 1) // 2

    filters = _pct_filter_bank(S, list_nl, realmag)            # np (K, S, S)
    KW = K * W
    KWp = ((KW + 127) // 128) * 128                            # lane-dense output columns
    SW = S * W
    T = jnp.asarray(_build_toeplitz_flat(filters, W, KWp))     # (S*W, KWp)

    NC = N * C
    x = image.reshape(NC, H, W).astype(jnp.float32)

    # Plane tile: target ~256 MXU rows (M = P_TILE*H), but keep the parallel
    # grid axis length >= 2 whenever possible so both v7x TensorCores get work.
    TARGET_M = 256
    P_TILE = max(1, min(TARGET_M // max(H, 1), NC))
    num_tiles = -(-NC // P_TILE)
    if num_tiles < 2 and NC >= 2:
        P_TILE = (NC + 1) // 2
        num_tiles = -(-NC // P_TILE)
    NC_pad = num_tiles * P_TILE
    if NC_pad != NC:
        x = jnp.pad(x, ((0, NC_pad - NC), (0, 0), (0, 0)))

    # Explicit scoped-VMEM budget: double-buffered x/T/o plus im2col staging,
    # clamped under v7x's 64 MiB/TC (and above the small v5e default).
    est = 4 * (2 * P_TILE * H * W
               + 2 * SW * KWp
               + 2 * P_TILE * H * KWp
               + P_TILE * H * SW)
    vmem_limit = int(min(max(2 * est, 32 << 20), 56 << 20))

    out = pl.pallas_call(
        functools.partial(_pct_conv_kernel, H=H, W=W, S=S, pad=pad,
                          P=P_TILE, SW=SW, KWp=KWp),
        out_shape=jax.ShapeDtypeStruct((NC_pad, H, KWp), jnp.float32),
        grid=(num_tiles,),
        in_specs=[
            pl.BlockSpec((P_TILE, H, W), lambda p: (p, 0, 0)),   # image planes
            pl.BlockSpec((SW, KWp), lambda p: (0, 0)),           # filters (constant -> resident)
        ],
        out_specs=pl.BlockSpec((P_TILE, H, KWp), lambda p: (p, 0, 0)),
        compiler_params=pltpu.CompilerParams(
            dimension_semantics=("parallel",),
            vmem_limit_bytes=vmem_limit),
    )(x, T)

    # Per-filter contiguous lane slices (no moveaxis / transpose HBM pass).
    results = []
    for k in range(K):
        rk = out[:NC, :, k * W:(k + 1) * W].reshape(N, C, H, W)
        results.append(rk)
    return results


def _reference_forward(image, filters):
    """Pure-JAX reference (lax conv), mirrors F.conv2d(..., padding='same', groups=C)."""
    C = image.shape[1]
    outs = []
    for i in range(filters.shape[0]):
        k = jnp.tile(jnp.asarray(filters[i])[None, None], (C, 1, 1, 1))  # (C,1,S,S)
        o = jax.lax.conv_general_dilated(
            image.astype(jnp.float32), k,
            window_strides=(1, 1), padding="SAME",
            dimension_numbers=("NCHW", "OIHW", "NCHW"),
            feature_group_count=C)
        outs.append(o)
    return outs


if __name__ == "__main__":
    key = jax.random.PRNGKey(0)
    N, C, H, W = 2, 3, 16, 16      # module hard-codes 3 channels (kernel.repeat(3,1,1,1))
    image_size = 5                 # PCT kernel spatial size
    list_nl = [(2, 1), (1, 3)]

    image = jax.random.normal(key, (N, C, H, W), dtype=jnp.float32)

    for realmag in (1, 0):
        outs = pct_kernel_layer_forward(image, image_size, list_nl, realmag)
        outs = [jax.block_until_ready(o) for o in outs]
        filters = _pct_filter_bank(image_size, list_nl, realmag)
        refs = _reference_forward(image, filters)
        for o, r in zip(outs, refs):
            np.testing.assert_allclose(np.asarray(o), np.asarray(r),
                                       rtol=1e-4, atol=1e-4)

    print("KERNEL_OK")
</pallas_src>

<mosaic_0001>
module attributes {stable_mosaic.version = 11 : i64} {
  func.func @_pct_conv_kernel(%arg0: i32, %arg1: memref<3x16x16xf32, #tpu.memory_space<vmem>>, %arg2: memref<80x128xf32, #tpu.memory_space<vmem>>, %arg3: memref<3x16x128xf32, #tpu.memory_space<vmem>>) attributes {dimension_semantics = [#tpu.dimension_semantics<parallel>], iteration_bounds = array<i64: 2>, scalar_prefetch = 0 : i64, scratch_operands = 0 : i64, tpu.core_type = #tpu.core_type<tc>, window_params = [{transform_indices = @transform_0, window_bounds = array<i64: 3, 16, 16>}, {pipeline_mode = #tpu.pipeline_mode<synchronous>, transform_indices = @transform_1, window_bounds = array<i64: 80, 128>}, {transform_indices = @transform_2, window_bounds = array<i64: 3, 16, 128>}]} {
    %c0 = arith.constant 0 : index
    %c0_0 = arith.constant 0 : index
    %c0_1 = arith.constant 0 : index
    %0 = vector.load %arg1[%c0, %c0_0, %c0_1] : memref<3x16x16xf32, #tpu.memory_space<vmem>>, vector<3x16x16xf32>
    %cst = arith.constant 0.000000e+00 : f32
    %1 = vector.broadcast %cst : f32 to vector<3x2x16xf32>
    %2 = vector.extract_strided_slice %0 {offsets = [0, 0, 0], sizes = [3, 14, 16], strides = [1, 1, 1]} : vector<3x16x16xf32> to vector<3x14x16xf32>
    %3 = tpu.concatenate %1, %2 in 1 : vector<3x2x16xf32>, vector<3x14x16xf32> -> vector<3x16x16xf32>
    %cst_2 = arith.constant 0.000000e+00 : f32
    %4 = vector.broadcast %cst_2 : f32 to vector<3x1x16xf32>
    %5 = vector.extract_strided_slice %0 {offsets = [0, 0, 0], sizes = [3, 15, 16], strides = [1, 1, 1]} : vector<3x16x16xf32> to vector<3x15x16xf32>
    %6 = tpu.concatenate %4, %5 in 1 : vector<3x1x16xf32>, vector<3x15x16xf32> -> vector<3x16x16xf32>
    %7 = vector.extract_strided_slice %0 {offsets = [0, 1, 0], sizes = [3, 15, 16], strides = [1, 1, 1]} : vector<3x16x16xf32> to vector<3x15x16xf32>
    %cst_3 = arith.constant 0.000000e+00 : f32
    %8 = vector.broadcast %cst_3 : f32 to vector<3x1x16xf32>
    %9 = tpu.concatenate %7, %8 in 1 : vector<3x15x16xf32>, vector<3x1x16xf32> -> vector<3x16x16xf32>
    %10 = vector.extract_strided_slice %0 {offsets = [0, 2, 0], sizes = [3, 14, 16], strides = [1, 1, 1]} : vector<3x16x16xf32> to vector<3x14x16xf32>
    %cst_4 = arith.constant 0.000000e+00 : f32
    %11 = vector.broadcast %cst_4 : f32 to vector<3x2x16xf32>
    %12 = tpu.concatenate %10, %11 in 1 : vector<3x14x16xf32>, vector<3x2x16xf32> -> vector<3x16x16xf32>
    %13 = tpu.concatenate %3, %6, %0, %9, %12 in 2 : vector<3x16x16xf32>, vector<3x16x16xf32>, vector<3x16x16xf32>, vector<3x16x16xf32>, vector<3x16x16xf32> -> vector<3x16x80xf32>
    %14 = vector.shape_cast %13 : vector<3x16x80xf32> to vector<48x80xf32>
    %c0_5 = arith.constant 0 : index
    %c0_6 = arith.constant 0 : index
    %15 = vector.load %arg2[%c0_5, %c0_6] : memref<80x128xf32, #tpu.memory_space<vmem>>, vector<80x128xf32>
    %cst_7 = arith.constant dense<0.000000e+00> : vector<48x128xf32>
    %16 = tpu.matmul %14, %15, %cst_7 {dimension_numbers = #tpu.dot_dimension_numbers<[1], [0], [0], [1], [0, 0, 1, 1], [], []>} : vector<48x80xf32>, vector<80x128xf32>, vector<48x128xf32> -> vector<48x128xf32>
    %17 = vector.shape_cast %16 : vector<48x128xf32> to vector<3x16x128xf32>
    %c0_8 = arith.constant 0 : index
    %c0_9 = arith.constant 0 : index
    %c0_10 = arith.constant 0 : index
    %18 = vector.load %arg3[%c0_8, %c0_9, %c0_10] : memref<3x16x128xf32, #tpu.memory_space<vmem>>, vector<3x16x128xf32>
    tpu.vector_store %arg3[%c0_8, %c0_9, %c0_10], %17 {strides = array<i32>} : memref<3x16x128xf32, #tpu.memory_space<vmem>>, vector<3x16x128xf32>,
    return
  }
  func.func @transform_0(%arg0: i32) -> (i32, i32, i32) {
    %c0_i32 = arith.constant 0 : i32
    %c0_i32_0 = arith.constant 0 : i32
    %c0_i32_1 = arith.constant 0 : i32
    return %arg0, %c0_i32, %c0_i32_0 : i32, i32, i32
  }
  func.func @transform_1(%arg0: i32) -> (i32, i32) {
    %c0_i32 = arith.constant 0 : i32
    %c0_i32_0 = arith.constant 0 : i32
    %c0_i32_1 = arith.constant 0 : i32
    return %c0_i32, %c0_i32_0 : i32, i32
  }
  func.func @transform_2(%arg0: i32) -> (i32, i32, i32) {
    %c0_i32 = arith.constant 0 : i32
    %c0_i32_0 = arith.constant 0 : i32
    %c0_i32_1 = arith.constant 0 : i32
    return %arg0, %c0_i32, %c0_i32_0 : i32, i32, i32
  }
}

</mosaic_0001>

<llo_original>
// kernel: tpu_custom_call.1
$region0: #{tpu_custom_call.1}
  #allocation0 [shape = 'u32[]', space=smem, size = 0x4, offset = 0x4, fixed_abs, tag = 'smem constant byte address 0x4 - core index']
  #allocation1 [shape = 'u32[144,128]{1,0:T(1,128)}', space=vmem, size = 0x12000, scoped, tag = 'internal scratch']
  %s0 = inlined_call_operand.hbm [shape: f32[6,16,16], index: 0, kind: input, shape index: {}]
  %s1 = inlined_call_operand.hbm [shape: f32[80,128], index: 1, kind: input, shape index: {}]
  %s2 = inlined_call_operand.hbm [shape: f32[6,16,128], index: 2, kind: output, shape index: {}]
  %s3 = sld [smem:[#allocation0]]
  $region49: #{tpu_custom_call.1} parent=0
    _
  %s5 = ssub.s32 1, %s3
  %s6 = scalar_select 0, %s5, %s3
  $region1: #{tpu_custom_call.1} parent=0
    #allocation2 [shape = 'u8[49152]{0}', space=vmem, size = 0xc000, scoped, tag = 'input window, operand 0']
    #allocation3 [shape = 's32[2]{0}', space=sflag, size = 0x8, scoped, tag = 'scoped memory for tpu_custom_call.1']
    #allocation4 [shape = 's32[2]{0}', space=sflag, size = 0x8, scoped, tag = 'scoped memory for tpu_custom_call.1']
    #allocation5 [shape = 'u8[40960]{0}', space=vmem, size = 0xa000, scoped, tag = 'input window, operand 1, single buffered']
    #allocation6 [shape = 's32[1]{0}', space=sflag, size = 0x4, scoped, tag = 'scoped memory for tpu_custom_call.1']
    #allocation7 [shape = 'u8[49152]{0}', space=vmem, size = 0xc000, scoped, tag = 'output window, operand 0']
    %7 = vsyncpa [#allocation3], 0
    %s8 = scalar_lea.sflag [#allocation3], 1
    %9 = vsyncpa %s8, 0
    %10 = vsyncpa [#allocation6], 0
    %11 = vsyncpa [#allocation4], 0
    %s12 = scalar_lea.sflag [#allocation4], 1
    %13 = vsyncpa %s12, 0
    loop: start=0, step=1, limit=4
    $region2: #{tpu_custom_call.1} parent=1 // loop_pre_header
      _
    $region3: #{tpu_custom_call.1} parent=1 // loop_header
      %s15 = sphi 0, %s19
      %p16 = scmp.ge.s32.totalorder %s15, 4
      %s25 = sphi 0, %s27
      %s28 = sphi 0, %s25
      %s29 = sphi 0, %s28
      %s45 = sphi 0, %s29
      %s49 = sphi 0, %s49
      %s51 = sphi 0, %s49
      %s52 = sphi 0, %s51
      %s66 = sphi 0, %s52
      %s72 = sphi 0, %s74
      %s75 = sphi 0, %s72
      %s76 = sphi 0, %s75
      %s92 = sphi 0, %s76
    $region4: #{tpu_custom_call.1} parent=1 // loop_header_branch
      %18 = sbr.rel (%p16) target = $region8
    $region5: #{tpu_custom_call.1} parent=1 // loop_body
      %s20 = ssub.s32 %s15, 1
      %s21 = ssub.s32 %s15, 2
      %s22 = sadd.s32 %s15, 1
      %s23 = ssub.s32 %s15, %s22
      %p24 = scmp.eq.s32.totalorder %s23, 0
      %s26 = sadd.s32 %s25, 1
      %s27 = scalar_select %p24, %s25, %s26
      %p30 = pneg %p24
      %p31 = scmp.eq.s32.totalorder %s15, 1
      %p32 = por %p30, %p31
      %p33 = scmp.ne.s32.totalorder %s25, %s28
      %p34 = scmp.eq.s32.totalorder %s15, 0
      %p35 = por %p33, %p34
      %p36 = scmp.ne.s32.totalorder %s25, %s28
      %p37 = scmp.eq.s32.totalorder %s20, 1
      %p38 = por %p36, %p37
      %p39 = scmp.ne.s32.totalorder %s28, %s29
      %p40 = scmp.eq.s32.totalorder %s20, 0
      %p41 = por %p39, %p40
      %p42 = scmp.ne.s32.totalorder %s28, %s29
      %p43 = scmp.eq.s32.totalorder %s21, 1
      %p44 = por %p42, %p43
      %p46 = scmp.ne.s32.totalorder %s29, %s45
      %p47 = scmp.eq.s32.totalorder %s21, 0
      %p48 = por %p46, %p47
      %s50 = sadd.s32 %s49, 1
      %p53 = scmp.eq.s32.totalorder %s15, 1
      %p54 = scmp.ne.s32.totalorder %s49, %s51
      %p55 = scmp.eq.s32.totalorder %s15, 0
      %p56 = por %p54, %p55
      %p57 = scmp.ne.s32.totalorder %s49, %s51
      %p58 = scmp.eq.s32.totalorder %s20, 1
      %p59 = por %p57, %p58
      %p60 = scmp.ne.s32.totalorder %s51, %s52
      %p61 = scmp.eq.s32.totalorder %s20, 0
      %p62 = por %p60, %p61
      %p63 = scmp.ne.s32.totalorder %s51, %s52
      %p64 = scmp.eq.s32.totalorder %s21, 1
      %p65 = por %p63, %p64
      %p67 = scmp.ne.s32.totalorder %s52, %s66
      %p68 = scmp.eq.s32.totalorder %s21, 0
      %p69 = por %p67, %p68
      %s70 = ssub.s32 %s15, %s22
      %p71 = scmp.eq.s32.totalorder %s70, 0
      %s73 = sadd.s32 %s72, 1
      %s74 = scalar_select %p71, %s72, %s73
      %p77 = pneg %p71
      %p78 = scmp.eq.s32.totalorder %s15, 1
      %p79 = por %p77, %p78
      %p80 = scmp.ne.s32.totalorder %s72, %s75
      %p81 = scmp.eq.s32.totalorder %s15, 0
      %p82 = por %p80, %p81
      %p83 = scmp.ne.s32.totalorder %s72, %s75
      %p84 = scmp.eq.s32.totalorder %s20, 1
      %p85 = por %p83, %p84
      %p86 = scmp.ne.s32.totalorder %s75, %s76
      %p87 = scmp.eq.s32.totalorder %s20, 0
      %p88 = por %p86, %p87
      %p89 = scmp.ne.s32.totalorder %s75, %s76
      %p90 = scmp.eq.s32.totalorder %s21, 1
      %p91 = por %p89, %p90
      %p93 = scmp.ne.s32.totalorder %s76, %s92
      %p94 = scmp.eq.s32.totalorder %s21, 0
      %p95 = por %p93, %p94
      %p96 = scmp.le.s32.totalorder 1, %s15
      %p97 = scmp.lt.s32.totalorder %s15, 3
      %p98 = pnand %p96, %p97
      %p99 = pneg %p98
      // Predicated region
      $region9: #{tpu_custom_call.1} parent=5 // pred_check
        _
      $region10: #{tpu_custom_call.1} parent=5 // pred_check_branch
        %101 = sbr.rel (%p98) target = $region12
      $region11: #{tpu_custom_call.1} parent=5 // pred_region
        %s102 = ssub.s32 %s15, 1
        // Predicated region
        $region13: #{tpu_custom_call.1} parent=11 // pred_check
          %p103 = pneg %p62
        $region14: #{tpu_custom_call.1} parent=11 // pred_check_branch
          %105 = sbr.rel (%p103) target = $region16
        $region15: #{tpu_custom_call.1} parent=11 // pred_region
          %s107 = ssub.s32 1280, 1280
          %108 = vsyncadd [#allocation6], %s107
          %s109 = sshll.u32 [#allocation5], 4
          %s110 = int_to_ptr.vmem [resolvable:$true] %s109
          %115 = dma.hbm_to_vmem [thread:$0]  %s1, 1280, %s110, [#allocation6], 128, 128, 8
        $region16: #{tpu_custom_call.1} parent=11 // pred_fallthru
          _
      $region12: #{tpu_custom_call.1} parent=5 // pred_fallthru
        _
      %p116 = scmp.lt.s32.totalorder %s15, 2
      // Predicated region
      $region17: #{tpu_custom_call.1} parent=5 // pred_check
        %p117 = pneg %p116
      $region18: #{tpu_custom_call.1} parent=5 // pred_check_branch
        %119 = sbr.rel (%p117) target = $region20
      $region19: #{tpu_custom_call.1} parent=5 // pred_region
        // Predicated region
        $region21: #{tpu_custom_call.1} parent=19 // pred_check
          %p120 = pneg %p35
        $region22: #{tpu_custom_call.1} parent=19 // pred_check_branch
          %122 = sbr.rel (%p120) target = $region24
        $region23: #{tpu_custom_call.1} parent=19 // pred_region
          %s123 = sand.u32 %s25, 1
          %s124 = scalar_lea.sflag [#allocation3], %s123
          %s125 = sand.u32 %s25, 1
          %s126 = smul.addr %s125, 48
          %s127 = scalar_lea.vmem [#allocation2], %s126
          %s128 = smul.u32 3, %s15
          %s130 = ssub.s32 768, 768
          %131 = vsyncadd %s124, %s130
          %s132 = smul.addr %s128, 2
          %s133 = smul.addr %s132, 128
          %s134 = scalar_lea.hbm %s0, %s133
          %s135 = sshll.u32 %s127, 4
          %s136 = int_to_ptr.vmem [resolvable:$true] %s135
          %141 = dma.hbm_to_vmem [thread:$0]  %s134, 768, %s136, %s124, 128, 128, 8
        $region24: #{tpu_custom_call.1} parent=19 // pred_fallthru
          _
      $region20: #{tpu_custom_call.1} parent=5 // pred_fallthru
        _
      %p142 = scmp.le.s32.totalorder 1, %s15
      %p143 = scmp.lt.s32.totalorder %s15, 3
      %p144 = pnand %p142, %p143
      %p145 = pneg %p144
      // Predicated region
      $region25: #{tpu_custom_call.1} parent=5 // pred_check
        _
      $region26: #{tpu_custom_call.1} parent=5 // pred_check_branch
        %147 = sbr.rel (%p144) target = $region28
      $region27: #{tpu_custom_call.1} parent=5 // pred_region
        %s148 = ssub.s32 %s15, 1
        %s149 = sand.u32 %s28, 1
        %s150 = scalar_lea.sflag [#allocation3], %s149
        %s151 = sand.u32 %s28, 1
        %s152 = smul.addr %s151, 48
        %s153 = scalar_lea.vmem [#allocation2], %s152
        // Predicated region
        $region29: #{tpu_custom_call.1} parent=27 // pred_check
          %p154 = pneg %p41
        $region30: #{tpu_custom_call.1} parent=27 // pred_check_branch
          %156 = sbr.rel (%p154) target = $region32
        $region31: #{tpu_custom_call.1} parent=27 // pred_region
          %157 = dma.done %s150, 768
        $region32: #{tpu_custom_call.1} parent=27 // pred_fallthru
          _
        // Predicated region
        $region33: #{tpu_custom_call.1} parent=27 // pred_check
          %p158 = pneg %p62
        $region34: #{tpu_custom_call.1} parent=27 // pred_check_branch
          %160 = sbr.rel (%p158) target = $region36
        $region35: #{tpu_custom_call.1} parent=27 // pred_region
          %161 = dma.done [#allocation6], 1280
        $region36: #{tpu_custom_call.1} parent=27 // pred_fallthru
          _
        %s162 = sand.u32 %s28, 1
        %s163 = scalar_lea.sflag [#allocation3], %s162
        %s164 = sand.u32 %s28, 1
        %s165 = smul.addr %s164, 48
        %s166 = scalar_lea.vmem [#allocation2], %s165
        %p167 = pneg %p41
        %p168 = pneg %p38
        %p169 = pneg %p62
        %p170 = pneg %p59
        %p171 = pneg %p88
        %p172 = pneg %p85
        %s173 = sand.u32 %s75, 1
        %s174 = scalar_lea.sflag [#allocation4], %s173
        %s175 = sand.u32 %s75, 1
        %s176 = smul.addr %s175, 48
        %s177 = scalar_lea.vmem [#allocation7], %s176
        %s178 = smul.u32 3, %s20
        %s179 = smul.u32 3, %s20
        %v180 = vld [vmem:[%s153] sm:$0xff]
        %v181 = vld [vmem:[%s153 + $0x8] sm:$0xff]
        %v182 = vld [vmem:[%s153 + $0x10] sm:$0xff]
        %v183 = vld [vmem:[%s153 + $0x18] sm:$0xff]
        %v184 = vld [vmem:[%s153 + $0x20] sm:$0xff]
        %v185 = vld [vmem:[%s153 + $0x28] sm:$0xff]
        %vm192 = vcmask 1041408
        %v193 = vrot.slane %v180, 6
        %v194 = vrot.slane %v181, 6
        %v195 = vsel %vm192, %v193, %v194
        %v196 = vrot.slane %v182, 6
        %v197 = vrot.slane %v183, 6
        %v198 = vsel %vm192, %v196, %v197
        %v199 = vrot.slane %v184, 6
        %v200 = vrot.slane %v185, 6
        %v201 = vsel %vm192, %v199, %v200
        %v208 = vsel %vm192, 0.0, %v193
        %v209 = vsel %vm192, 0.0, %v196
        %v210 = vsel %vm192, 0.0, %v199
        %vm211 = vcmask 1040384
        %v212 = vrot.slane %v180, 7
        %v213 = vrot.slane %v181, 7
        %v214 = vsel %vm211, %v212, %v213
        %v215 = vrot.slane %v182, 7
        %v216 = vrot.slane %v183, 7
        %v217 = vsel %vm211, %v215, %v216
        %v218 = vrot.slane %v184, 7
        %v219 = vrot.slane %v185, 7
        %v220 = vsel %vm211, %v218, %v219
        %v224 = vsel %vm211, 0.0, %v212
        %v225 = vsel %vm211, 0.0, %v215
        %v226 = vsel %vm211, 0.0, %v218
        %vm227 = vcmask 1046528
        %v228 = vrot.slane %v180, 1
        %v229 = vrot.slane %v181, 1
        %v230 = vsel %vm227, %v228, %v229
        %v231 = vrot.slane %v182, 1
        %v232 = vrot.slane %v183, 1
        %v233 = vsel %vm227, %v231, %v232
        %v234 = vrot.slane %v184, 1
        %v235 = vrot.slane %v185, 1
        %v236 = vsel %vm227, %v234, %v235
        %v240 = vsel %vm227, %v229, 0.0
        %v241 = vsel %vm227, %v232, 0.0
        %v242 = vsel %vm227, %v235, 0.0
        %vm243 = vcmask 1045504
        %v244 = vrot.slane %v180, 2
        %v245 = vrot.slane %v181, 2
        %v246 = vsel %vm243, %v244, %v245
        %v247 = vrot.slane %v182, 2
        %v248 = vrot.slane %v183, 2
        %v249 = vsel %vm243, %v247, %v248
        %v250 = vrot.slane %v184, 2
        %v251 = vrot.slane %v185, 2
        %v252 = vsel %vm243, %v250, %v251
        %v256 = vsel %vm243, %v245, 0.0
        %v257 = vsel %vm243, %v248, 0.0
        %v258 = vsel %vm243, %v251, 0.0
        %262 = vrot.lane.b32.xlu0 %v224, 16
        %v263 = vpop.permute.xlu0 %262
        %264 = vrot.lane.b32.xlu0 %v214, 16
        %v265 = vpop.permute.xlu0 %264
        %266 = vrot.lane.b32.xlu0 %v225, 16
        %v267 = vpop.permute.xlu0 %266
        %268 = vrot.lane.b32.xlu0 %v217, 16
        %v269 = vpop.permute.xlu0 %268
        %270 = vrot.lane.b32.xlu0 %v226, 16
        %v271 = vpop.permute.xlu0 %270
        %272 = vrot.lane.b32.xlu0 %v220, 16
        %v273 = vpop.permute.xlu0 %272
        %280 = vrot.lane.b32.xlu0 %v180, 32
        %v281 = vpop.permute.xlu0 %280
        %282 = vrot.lane.b32.xlu0 %v181, 32
        %v283 = vpop.permute.xlu0 %282
        %284 = vrot.lane.b32.xlu0 %v182, 32
        %v285 = vpop.permute.xlu0 %284
        %286 = vrot.lane.b32.xlu0 %v183, 32
        %v287 = vpop.permute.xlu0 %286
        %288 = vrot.lane.b32.xlu0 %v184, 32
        %v289 = vpop.permute.xlu0 %288
        %290 = vrot.lane.b32.xlu0 %v185, 32
        %v291 = vpop.permute.xlu0 %290
        %301 = vrot.lane.b32.xlu0 %v230, 48
        %v302 = vpop.permute.xlu0 %301
        %303 = vrot.lane.b32.xlu0 %v240, 48
        %v304 = vpop.permute.xlu0 %303
        %305 = vrot.lane.b32.xlu0 %v233, 48
        %v306 = vpop.permute.xlu0 %305
        %307 = vrot.lane.b32.xlu0 %v241, 48
        %v308 = vpop.permute.xlu0 %307
        %309 = vrot.lane.b32.xlu0 %v236, 48
        %v310 = vpop.permute.xlu0 %309
        %311 = vrot.lane.b32.xlu0 %v242, 48
        %v312 = vpop.permute.xlu0 %311
        %322 = vrot.lane.b32.xlu0 %v246, 64
        %v323 = vpop.permute.xlu0 %322
        %324 = vrot.lane.b32.xlu0 %v256, 64
        %v325 = vpop.permute.xlu0 %324
        %326 = vrot.lane.b32.xlu0 %v249, 64
        %v327 = vpop.permute.xlu0 %326
        %328 = vrot.lane.b32.xlu0 %v257, 64
        %v329 = vpop.permute.xlu0 %328
        %330 = vrot.lane.b32.xlu0 %v252, 64
        %v331 = vpop.permute.xlu0 %330
        %332 = vrot.lane.b32.xlu0 %v258, 64
        %v333 = vpop.permute.xlu0 %332
        %vm340 = vcmask 130048
        %v341 = vsel %vm340, %v208, %v263
        %v342 = vsel %vm340, %v195, %v265
        %v343 = vsel %vm340, %v209, %v267
        %v344 = vsel %vm340, %v198, %v269
        %v345 = vsel %vm340, %v210, %v271
        %v346 = vsel %vm340, %v201, %v273
        %vm347 = vcmask 261120
        %v348 = vsel %vm347, %v341, %v281
        %v349 = vsel %vm347, %v342, %v283
        %v350 = vsel %vm347, %v343, %v285
        %v351 = vsel %vm347, %v344, %v287
        %v352 = vsel %vm347, %v345, %v289
        %v353 = vsel %vm347, %v346, %v291
        %vm354 = vcmask 392192
        %v355 = vsel %vm354, %v348, %v302
        %v356 = vsel %vm354, %v349, %v304
        %v357 = vsel %vm354, %v350, %v306
        %v358 = vsel %vm354, %v351, %v308
        %v359 = vsel %vm354, %v352, %v310
        %v360 = vsel %vm354, %v353, %v312
        %vm361 = vcmask 523264
        %v362 = vsel %vm361, %v355, %v323
        %v363 = vsel %vm361, %v356, %v325
        %v364 = vsel %vm361, %v357, %v327
        %v365 = vsel %vm361, %v358, %v329
        %v366 = vsel %vm361, %v359, %v331
        %v367 = vsel %vm361, %v360, %v333
        %v368 = vld [vmem:[#allocation5] sm:$0xff]
        %v369 = vld [vmem:[#allocation5 + $0x8] sm:$0xff]
        %v370 = vld [vmem:[#allocation5 + $0x10] sm:$0xff]
        %v371 = vld [vmem:[#allocation5 + $0x18] sm:$0xff]
        %v372 = vld [vmem:[#allocation5 + $0x20] sm:$0xff]
        %v373 = vld [vmem:[#allocation5 + $0x28] sm:$0xff]
        %v374 = vld [vmem:[#allocation5 + $0x30] sm:$0xff]
        %v375 = vld [vmem:[#allocation5 + $0x38] sm:$0xff]
        %v376 = vld [vmem:[#allocation5 + $0x40] sm:$0xff]
        %v377 = vld [vmem:[#allocation5 + $0x48] sm:$0xff]
        %vm378 = vcmask 654336
        %v380 = vsel %vm378, %v362, 0
        %v383 = vsel %vm378, %v363, 0
        %v386 = vsel %vm378, %v364, 0
        %v389 = vsel %vm378, %v365, 0
        %v392 = vsel %vm378, %v366, 0
        %v395 = vsel %vm378, %v367, 0
        %397 = vmatprep.subr.mxu0 0.0
        %398 = vmatpush1.msra.mxu0 %v368
        %399 = vmatprep.subr.mxu0 0.0
        %400 = vmatpush1.msra.mxu0 %v369
        %401 = vmatprep.subr.mxu0 0.0
        %402 = vmatpush1.msra.mxu0 %v370
        %403 = vmatprep.subr.mxu0 0.0
        %404 = vmatpush1.msra.mxu0 %v371
        %405 = vmatprep.subr.mxu0 0.0
        %406 = vmatpush1.msra.mxu0 %v372
        %407 = vmatprep.subr.mxu0 0.0
        %408 = vmatpush1.msra.mxu0 %v373
        %409 = vmatprep.subr.mxu0 0.0
        %410 = vmatpush1.msra.mxu0 %v374
        %411 = vmatprep.subr.mxu0 0.0
        %412 = vmatpush1.msra.mxu0 %v375
        %413 = vmatprep.subr.mxu0 0.0
        %414 = vmatpush1.msra.mxu0 %v376
        %415 = vmatprep.subr.mxu0 0.0
        %416 = vmatpush1.msra.mxu0 %v377
        %417 = vmatprep.subr.mxu0 0.0
        %418 = vmatpush1.msra.mxu0 0.0
        %419 = vmatprep.subr.mxu0 0.0
        %420 = vmatpush1.msra.mxu0 0.0
        %421 = vmatprep.subr.mxu0 0.0
        %422 = vmatpush1.msra.mxu0 0.0
        %423 = vmatprep.subr.mxu0 0.0
        %424 = vmatpush1.msra.mxu0 0.0
        %425 = vmatprep.subr.mxu0 0.0
        %426 = vmatpush1.msra.mxu0 0.0
        %427 = vmatprep.subr.mxu0 0.0
        %428 = vmatpush1.msra.mxu0 0.0
        %429 = vmatprep.subr.mxu0 0.0
        %430 = vmatpush1.msra.mxu0 0.0
        %431 = vmatprep.subr.mxu0 0.0
        %432 = vmatpush1.msra.mxu0 0.0
        %433 = vmatprep.subr.mxu0 0.0
        %434 = vmatpush1.msra.mxu0 0.0
        %435 = vmatprep.subr.mxu0 0.0
        %436 = vmatpush1.msra.mxu0 0.0
        %437 = vmatprep.subr.mxu0 0.0
        %438 = vmatpush1.msra.mxu0 0.0
        %439 = vmatprep.subr.mxu0 0.0
        %440 = vmatpush1.msra.mxu0 0.0
        %441 = vmatprep.subr.mxu0 0.0
        %442 = vmatpush1.msra.mxu0 0.0
        %443 = vmatprep.subr.mxu0 0.0
        %444 = vmatpush1.msra.mxu0 0.0
        %445 = vmatprep.subr.mxu0 0.0
        %446 = vmatpush1.msra.mxu0 0.0
        %447 = vmatprep.subr.mxu0 0.0
        %448 = vmatpush1.msra.mxu0 0.0
        %449 = vmatprep.subr.mxu0 0.0
        %450 = vmatpush1.msra.mxu0 0.0
        %451 = vmatprep.subr.mxu0 0.0
        %452 = vmatpush1.msra.mxu0 0.0
        %453 = vmatprep.subr.mxu0 0.0
        %454 = vmatpush1.msra.mxu0 0.0
        %455 = vmatprep.subr.mxu0 0.0
        %456 = vmatpush1.msra.mxu0 0.0
        %457 = vmatprep.subr.mxu0 0.0
        %458 = vmatpush1.msra.mxu0 0.0
        %459 = vmatprep.subr.mxu0 0.0
        %460 = vmatpush1.msra.mxu0 0.0
        %461 = vmatprep.mubr.f32.mxu0 0.0
        %462 = vmatmul.mubr.f32.gmra.mrb[0].mxu0 %v380
        %v463 = vpop.f32.mrb[0].mxu0
        %v464 = vadd.f32 0.0, %v463
        %v465 = vpop.f32.mrb[0].mxu0
        %466 = vmatprep.mubr.f32.mxu0 0.0
        %467 = vmatmul.mubr.f32.gmra.mrb[0].mxu0 %v383
        %v468 = vpop.f32.mrb[0].mxu0
        %v469 = vadd.f32 0.0, %v468
        %v470 = vpop.f32.mrb[0].mxu0
        %471 = vmatprep.mubr.f32.mxu0 0.0
        %472 = vmatmul.mubr.f32.gmra.mrb[0].mxu0 %v386
        %v473 = vpop.f32.mrb[0].mxu0
        %v474 = vadd.f32 0.0, %v473
        %v475 = vpop.f32.mrb[0].mxu0
        %476 = vmatprep.mubr.f32.mxu0 0.0
        %477 = vmatmul.mubr.f32.gmra.mrb[0].mxu0 %v389
        %v478 = vpop.f32.mrb[0].mxu0
        %v479 = vadd.f32 0.0, %v478
        %v480 = vpop.f32.mrb[0].mxu0
        %481 = vmatprep.mubr.f32.mxu0 0.0
        %482 = vmatmul.mubr.f32.gmra.mrb[0].mxu0 %v392
        %v483 = vpop.f32.mrb[0].mxu0
        %v484 = vadd.f32 0.0, %v483
        %v485 = vpop.f32.mrb[0].mxu0
        %486 = vmatprep.mubr.f32.mxu0 0.0
        %487 = vmatmul.mubr.f32.gmra.mrb[0].mxu0 %v395
        %v488 = vpop.f32.mrb[0].mxu0
        %v489 = vadd.f32 0.0, %v488
        %v490 = vpop.f32.mrb[0].mxu0
        %491 = vdwg.mxu0
        %492 = vst [vmem:[%s177] sm:$0xff] %v464
        %493 = vst [vmem:[%s177 + $0x8] sm:$0xff] %v469
        %494 = vst [vmem:[%s177 + $0x10] sm:$0xff] %v474
        %495 = vst [vmem:[%s177 + $0x18] sm:$0xff] %v479
        %496 = vst [vmem:[%s177 + $0x20] sm:$0xff] %v484
        %497 = vst [vmem:[%s177 + $0x28] sm:$0xff] %v489
        %s498 = sand.u32 %s75, 1
        %s499 = scalar_lea.sflag [#allocation4], %s498
        %s500 = sand.u32 %s75, 1
        %s501 = smul.addr %s500, 48
        %s502 = scalar_lea.vmem [#allocation7], %s501
        // Predicated region
        $region37: #{tpu_custom_call.1} parent=27 // pred_check
          %p503 = pneg %p85
        $region38: #{tpu_custom_call.1} parent=27 // pred_check_branch
          %505 = sbr.rel (%p503) target = $region40
        $region39: #{tpu_custom_call.1} parent=27 // pred_region
          %s506 = smul.u32 3, %s20
          %s508 = ssub.s32 768, 768
          %509 = vsyncadd %s499, %s508
          %s510 = smul.addr %s506, 2
          %s511 = smul.addr %s510, 128
          %s512 = scalar_lea.hbm %s2, %s511
          %s513 = sshll.u32 %s502, 4
          %s514 = int_to_ptr.vmem [resolvable:$true] %s513
          %519 = dma.vmem_to_hbm [thread:$0]  %s514, 768, %s512, %s499, 128, 128, 8
        $region40: #{tpu_custom_call.1} parent=27 // pred_fallthru
          _
      $region28: #{tpu_custom_call.1} parent=5 // pred_fallthru
        _
      %p520 = scmp.le.s32.totalorder 2, %s15
      // Predicated region
      $region41: #{tpu_custom_call.1} parent=5 // pred_check
        %p521 = pneg %p520
      $region42: #{tpu_custom_call.1} parent=5 // pred_check_branch
        %523 = sbr.rel (%p521) target = $region44
      $region43: #{tpu_custom_call.1} parent=5 // pred_region
        %s524 = ssub.s32 %s15, 2
        // Predicated region
        $region45: #{tpu_custom_call.1} parent=43 // pred_check
          %p525 = pneg %p91
        $region46: #{tpu_custom_call.1} parent=43 // pred_check_branch
          %527 = sbr.rel (%p525) target = $region48
        $region47: #{tpu_custom_call.1} parent=43 // pred_region
          %s528 = sand.u32 %s76, 1
          %s529 = scalar_lea.sflag [#allocation4], %s528
          %s530 = sand.u32 %s76, 1
          %s531 = smul.addr %s530, 48
          %s532 = scalar_lea.vmem [#allocation7], %s531
          %533 = dma.done %s529, 768
        $region48: #{tpu_custom_call.1} parent=43 // pred_fallthru
          _
      $region44: #{tpu_custom_call.1} parent=5 // pred_fallthru
        _
    $region6: #{tpu_custom_call.1} parent=1 // loop_footer
      %s19 = sadd.s32 1, %s15
    $region7: #{tpu_custom_call.1} parent=1 // loop_footer_branch
      %14 = sbr.rel target = $region3
    $region8: #{tpu_custom_call.1} parent=1 // loop_exit
      _
    %534 = vsyncpa [#allocation3], 1
    %s535 = scalar_lea.sflag [#allocation3], 1
    %536 = vsyncpa %s535, 1
    %537 = vsyncpa [#allocation6], 1
    %538 = vsyncpa [#allocation4], 1
    %s539 = scalar_lea.sflag [#allocation4], 1
    %540 = vsyncpa %s539, 1

</llo_original>
